<compile_context>
chip_gen: v5e
topology: v5e:2x2
jax: 0.10.0
libtpu: 0.0.40
codegen_flags: <defaults>
</compile_context>

<pallas_src>
import functools

import jax
import jax.numpy as jnp
from jax.experimental import pallas as pl
from jax.experimental.pallas import tpu as pltpu


def _shift_axis(x, shift, axis):
    """out[..., i, ...] = x[..., i - shift, ...] if in bounds else 0 (static shift)."""
    if shift == 0:
        return x
    size = x.shape[axis]
    if abs(shift) >= size:
        return jnp.zeros_like(x)
    pad_shape = list(x.shape)
    pad_shape[axis] = abs(shift)
    zeros = jnp.zeros(pad_shape, x.dtype)
    if shift > 0:
        kept = jax.lax.slice_in_dim(x, 0, size - shift, axis=axis)
        return jnp.concatenate([zeros, kept], axis=axis)
    kept = jax.lax.slice_in_dim(x, -shift, size, axis=axis)
    return jnp.concatenate([kept, zeros], axis=axis)


def _shift2d_kernel(x_ref, o_ref, *, vert, horz):
    # Build the shifted block in registers and store it exactly once: a single
    # unmasked full-block store (no zero-fill pass, no masked partial store).
    x = x_ref[...]                      # (G, H, W) planes for this grid step
    x = _shift_axis(x, vert, axis=1)    # vertical shift  (sublane axis)
    x = _shift_axis(x, horz, axis=2)    # horizontal shift (lane axis)
    o_ref[...] = x


def _vmem_capacity_bytes():
    try:
        info = pltpu.get_tpu_info()
        cap = getattr(info, "vmem_capacity_bytes", None)
        if cap:
            return int(cap)
    except Exception:
        pass
    return 64 << 20  # conservative default (v7x per-TC VMEM)


def shift2d_ref(x, shift):
    """Pure-JAX reference mirroring the PyTorch ZeroPad2d + Crop2d composition."""
    vert, horz = int(shift[0]), int(shift[1])
    _, _, H, W = x.shape
    y_a, y_b = (abs(vert), 0) if vert >= 0 else (0, abs(vert))
    x_a, x_b = (abs(horz), 0) if horz >= 0 else (0, abs(horz))
    padded = jnp.pad(x, ((0, 0), (0, 0), (y_a, y_b), (x_a, x_b)))
    return padded[:, :, y_b:y_b + H, x_b:x_b + W]


def shift2d(x, shift):
    """Pallas Shift2d.  x: (N, C, H, W); shift = (vert, horz) static ints."""
    vert, horz = int(shift[0]), int(shift[1])
    N, C, H, W = x.shape

    # Fast paths.
    if vert == 0 and horz == 0:
        return x
    if abs(vert) >= H or abs(horz) >= W:
        # Output is all zeros -> never read the input (write-only degenerate op).
        return jnp.zeros_like(x)

    NC = N * C
    itemsize = jnp.dtype(x.dtype).itemsize
    plane_bytes = H * W * itemsize

    capacity = _vmem_capacity_bytes()
    # Per-buffer budget: input + output blocks are each double-buffered by the
    # pipeline (4 live buffers), so keep 4 * budget comfortably under VMEM.
    budget_bytes = (12 << 20) if capacity >= (96 << 20) else (6 << 20)

    if 4 * plane_bytes + (2 << 20) > (capacity * 3) // 4:
        # TODO(synk): add an H-tiled Pallas path (shift-offset / halo DMA on the
        # row axis) for planes too large to double-buffer in VMEM; until such
        # shapes appear, use the XLA pad+slice path rather than fail to compile.
        return shift2d_ref(x, shift)

    x_flat = x.reshape(NC, H, W)

    tile = min(max(1, budget_bytes // plane_bytes), NC)
    # On 2-TensorCore parts (v7x) keep >= 2 (best-effort even) grid steps for
    # large tensors so the 'parallel' axis shards evenly across cores; tiny
    # tensors stay at a single step to minimize per-step pipeline overhead.
    if NC * plane_bytes > (2 << 20) and NC >= 2:
        steps = max(2, pl.cdiv(NC, tile))
        if steps % 2:
            steps += 1  # awkward NC may still give an odd grid; harmless
        tile = max(1, pl.cdiv(NC, steps))
    grid = (pl.cdiv(NC, tile),)

    # in + out blocks, double-buffered, plus headroom.
    vmem_limit = int(max(4 << 20, 4 * tile * plane_bytes + (2 << 20)))

    kernel = functools.partial(_shift2d_kernel, vert=vert, horz=horz)

    out = pl.pallas_call(
        kernel,
        out_shape=jax.ShapeDtypeStruct((NC, H, W), x.dtype),
        grid_spec=pltpu.PrefetchScalarGridSpec(
            num_scalar_prefetch=0,
            grid=grid,
            # Last two block dims are the full (H, W) extents -> satisfies the
            # (8, 128) block constraint for any H/W.
            in_specs=[pl.BlockSpec((tile, H, W), lambda i: (i, 0, 0))],
            out_specs=pl.BlockSpec((tile, H, W), lambda i: (i, 0, 0)),
        ),
        compiler_params=pltpu.CompilerParams(
            dimension_semantics=("parallel",),
            vmem_limit_bytes=vmem_limit,
        ),
    )(x_flat)

    return out.reshape(N, C, H, W)


if __name__ == "__main__":
    N, C, H, W = 2, 4, 16, 16
    key = jax.random.PRNGKey(0)
    x = jax.random.normal(key, (N, C, H, W), dtype=jnp.float32)

    # Cover both signs, zero components, and an out-of-range shift.
    # TODO(synk): also validate bf16 (packed-sublane layout) on hardware.
    for shift in [(3, -2), (-1, 4), (0, 5), (16, 0), (0, 0)]:
        out = jax.block_until_ready(shift2d(x, shift))
        ref = jax.block_until_ready(shift2d_ref(x, shift))
        assert out.shape == x.shape and out.dtype == x.dtype
        assert jnp.array_equal(out, ref), (
            f"shift={shift}: max abs diff = {jnp.max(jnp.abs(out - ref))}"
        )

    print("KERNEL_OK")
</pallas_src>

<mosaic_0001>
module attributes {stable_mosaic.version = 11 : i64} {
  func.func @_shift2d_kernel(%arg0: i32, %arg1: memref<8x16x16xf32, #tpu.memory_space<vmem>>, %arg2: memref<8x16x16xf32, #tpu.memory_space<vmem>>) attributes {dimension_semantics = [#tpu.dimension_semantics<parallel>], iteration_bounds = array<i64: 1>, scalar_prefetch = 0 : i64, scratch_operands = 0 : i64, tpu.core_type = #tpu.core_type<tc>, window_params = [{transform_indices = @transform_0, window_bounds = array<i64: 8, 16, 16>}, {transform_indices = @transform_1, window_bounds = array<i64: 8, 16, 16>}]} {
    %c0 = arith.constant 0 : index
    %c0_0 = arith.constant 0 : index
    %c0_1 = arith.constant 0 : index
    %0 = vector.load %arg1[%c0, %c0_0, %c0_1] : memref<8x16x16xf32, #tpu.memory_space<vmem>>, vector<8x16x16xf32>
    %cst = arith.constant 0.000000e+00 : f32
    %1 = vector.broadcast %cst : f32 to vector<8x3x16xf32>
    %2 = vector.extract_strided_slice %0 {offsets = [0, 0, 0], sizes = [8, 13, 16], strides = [1, 1, 1]} : vector<8x16x16xf32> to vector<8x13x16xf32>
    %3 = tpu.concatenate %1, %2 in 1 : vector<8x3x16xf32>, vector<8x13x16xf32> -> vector<8x16x16xf32>
    %cst_2 = arith.constant 0.000000e+00 : f32
    %4 = vector.broadcast %cst_2 : f32 to vector<8x16x2xf32>
    %5 = vector.extract_strided_slice %3 {offsets = [0, 0, 2], sizes = [8, 16, 14], strides = [1, 1, 1]} : vector<8x16x16xf32> to vector<8x16x14xf32>
    %6 = tpu.concatenate %5, %4 in 2 : vector<8x16x14xf32>, vector<8x16x2xf32> -> vector<8x16x16xf32>
    %c0_3 = arith.constant 0 : index
    %c0_4 = arith.constant 0 : index
    %c0_5 = arith.constant 0 : index
    %7 = vector.load %arg2[%c0_3, %c0_4, %c0_5] : memref<8x16x16xf32, #tpu.memory_space<vmem>>, vector<8x16x16xf32>
    tpu.vector_store %arg2[%c0_3, %c0_4, %c0_5], %6 {strides = array<i32>} : memref<8x16x16xf32, #tpu.memory_space<vmem>>, vector<8x16x16xf32>,
    return
  }
  func.func @transform_0(%arg0: i32) -> (i32, i32, i32) {
    %c0_i32 = arith.constant 0 : i32
    %c0_i32_0 = arith.constant 0 : i32
    %c0_i32_1 = arith.constant 0 : i32
    return %arg0, %c0_i32, %c0_i32_0 : i32, i32, i32
  }
  func.func @transform_1(%arg0: i32) -> (i32, i32, i32) {
    %c0_i32 = arith.constant 0 : i32
    %c0_i32_0 = arith.constant 0 : i32
    %c0_i32_1 = arith.constant 0 : i32
    return %arg0, %c0_i32, %c0_i32_0 : i32, i32, i32
  }
}

</mosaic_0001>

<llo_original>
// kernel: tpu_custom_call.1
$region0: #{tpu_custom_call.1}
  #allocation0 [shape = 'u32[]', space=smem, size = 0x4, offset = 0x4, fixed_abs, tag = 'smem constant byte address 0x4 - core index']
  #allocation1 [shape = 'u32[72,128]{1,0:T(1,128)}', space=vmem, size = 0x9000, scoped, tag = 'internal scratch']
  %s0 = inlined_call_operand.hbm [shape: f32[8,16,16], index: 0, kind: input, shape index: {}]
  %s1 = inlined_call_operand.hbm [shape: f32[8,16,16], index: 1, kind: output, shape index: {}]
  %s2 = sld [smem:[#allocation0]]
  $region18: #{tpu_custom_call.1} parent=0
    _
  %s4 = ssub.s32 1, %s2
  %s5 = scalar_select 0, %s4, %s2
  $region1: #{tpu_custom_call.1} parent=0
    #allocation2 [shape = 'u8[65536]{0}', space=vmem, size = 0x10000, scoped, tag = 'input window, operand 0, single buffered']
    #allocation3 [shape = 's32[1]{0}', space=sflag, size = 0x4, scoped, tag = 'scoped memory for tpu_custom_call.1']
    #allocation4 [shape = 's32[1]{0}', space=sflag, size = 0x4, scoped, tag = 'scoped memory for tpu_custom_call.1']
    #allocation5 [shape = 'u8[65536]{0}', space=vmem, size = 0x10000, scoped, tag = 'output window, operand 0, single buffered']
    %6 = vsyncpa [#allocation3], 0
    %7 = vsyncpa [#allocation4], 0
    // Predicated region
    $region2: #{tpu_custom_call.1} parent=1 // pred_check
      _
    $region3: #{tpu_custom_call.1} parent=1 // pred_check_branch
      %9 = sbr.rel (0) target = $region5
    $region4: #{tpu_custom_call.1} parent=1 // pred_region
      %11 = vsyncadd [#allocation3], 0
      %s12 = sshll.u32 %s0, 4
      %s13 = int_to_ptr.hbm [resolvable:$true] %s12
      %s14 = sshll.u32 [#allocation2], 4
      %s15 = int_to_ptr.vmem [resolvable:$true] %s14
      %20 = dma.hbm_to_vmem [thread:$0]  %s13, 2048, %s15, [#allocation3], 128, 128, 8
    $region5: #{tpu_custom_call.1} parent=1 // pred_fallthru
      _
    // Predicated region
    $region6: #{tpu_custom_call.1} parent=1 // pred_check
      _
    $region7: #{tpu_custom_call.1} parent=1 // pred_check_branch
      %22 = sbr.rel (0) target = $region9
    $region8: #{tpu_custom_call.1} parent=1 // pred_region
      %24 = dma.done [#allocation3], 2048
    $region9: #{tpu_custom_call.1} parent=1 // pred_fallthru
      _
    %v25 = vld [vmem:[#allocation2] sm:$0xff]
    %v26 = vld [vmem:[#allocation2 + $0x8] sm:$0xff]
    %v27 = vld [vmem:[#allocation2 + $0x10] sm:$0xff]
    %v28 = vld [vmem:[#allocation2 + $0x18] sm:$0xff]
    %v29 = vld [vmem:[#allocation2 + $0x20] sm:$0xff]
    %v30 = vld [vmem:[#allocation2 + $0x28] sm:$0xff]
    %v31 = vld [vmem:[#allocation2 + $0x30] sm:$0xff]
    %v32 = vld [vmem:[#allocation2 + $0x38] sm:$0xff]
    %v33 = vld [vmem:[#allocation2 + $0x40] sm:$0xff]
    %v34 = vld [vmem:[#allocation2 + $0x48] sm:$0xff]
    %v35 = vld [vmem:[#allocation2 + $0x50] sm:$0xff]
    %v36 = vld [vmem:[#allocation2 + $0x58] sm:$0xff]
    %v37 = vld [vmem:[#allocation2 + $0x60] sm:$0xff]
    %v38 = vld [vmem:[#allocation2 + $0x68] sm:$0xff]
    %v39 = vld [vmem:[#allocation2 + $0x70] sm:$0xff]
    %v40 = vld [vmem:[#allocation2 + $0x78] sm:$0xff]
    %vm57 = vcmask 1042432
    %v58 = vrot.slane %v25, 5
    %v59 = vrot.slane %v26, 5
    %v60 = vsel %vm57, %v58, %v59
    %v61 = vrot.slane %v27, 5
    %v62 = vrot.slane %v28, 5
    %v63 = vsel %vm57, %v61, %v62
    %v64 = vrot.slane %v29, 5
    %v65 = vrot.slane %v30, 5
    %v66 = vsel %vm57, %v64, %v65
    %v67 = vrot.slane %v31, 5
    %v68 = vrot.slane %v32, 5
    %v69 = vsel %vm57, %v67, %v68
    %v70 = vrot.slane %v33, 5
    %v71 = vrot.slane %v34, 5
    %v72 = vsel %vm57, %v70, %v71
    %v73 = vrot.slane %v35, 5
    %v74 = vrot.slane %v36, 5
    %v75 = vsel %vm57, %v73, %v74
    %v76 = vrot.slane %v37, 5
    %v77 = vrot.slane %v38, 5
    %v78 = vsel %vm57, %v76, %v77
    %v79 = vrot.slane %v39, 5
    %v80 = vrot.slane %v40, 5
    %v81 = vsel %vm57, %v79, %v80
    %v90 = vsel %vm57, 0.0, %v58
    %v91 = vsel %vm57, 0.0, %v61
    %v92 = vsel %vm57, 0.0, %v64
    %v93 = vsel %vm57, 0.0, %v67
    %v94 = vsel %vm57, 0.0, %v70
    %v95 = vsel %vm57, 0.0, %v73
    %v96 = vsel %vm57, 0.0, %v76
    %v97 = vsel %vm57, 0.0, %v79
    %106 = vrot.lane.b32.xlu0 %v90, 126
    %v107 = vpop.permute.xlu0 %106
    %108 = vrot.lane.b32.xlu0 %v60, 126
    %v109 = vpop.permute.xlu0 %108
    %110 = vrot.lane.b32.xlu0 %v91, 126
    %v111 = vpop.permute.xlu0 %110
    %112 = vrot.lane.b32.xlu0 %v63, 126
    %v113 = vpop.permute.xlu0 %112
    %114 = vrot.lane.b32.xlu0 %v92, 126
    %v115 = vpop.permute.xlu0 %114
    %116 = vrot.lane.b32.xlu0 %v66, 126
    %v117 = vpop.permute.xlu0 %116
    %118 = vrot.lane.b32.xlu0 %v93, 126
    %v119 = vpop.permute.xlu0 %118
    %120 = vrot.lane.b32.xlu0 %v69, 126
    %v121 = vpop.permute.xlu0 %120
    %122 = vrot.lane.b32.xlu0 %v94, 126
    %v123 = vpop.permute.xlu0 %122
    %124 = vrot.lane.b32.xlu0 %v72, 126
    %v125 = vpop.permute.xlu0 %124
    %126 = vrot.lane.b32.xlu0 %v95, 126
    %v127 = vpop.permute.xlu0 %126
    %128 = vrot.lane.b32.xlu0 %v75, 126
    %v129 = vpop.permute.xlu0 %128
    %130 = vrot.lane.b32.xlu0 %v96, 126
    %v131 = vpop.permute.xlu0 %130
    %132 = vrot.lane.b32.xlu0 %v78, 126
    %v133 = vpop.permute.xlu0 %132
    %134 = vrot.lane.b32.xlu0 %v97, 126
    %v135 = vpop.permute.xlu0 %134
    %136 = vrot.lane.b32.xlu0 %v81, 126
    %v137 = vpop.permute.xlu0 %136
    %vm154 = vcmask 113664
    %v155 = vsel %vm154, %v107, 0.0
    %v156 = vsel %vm154, %v109, 0.0
    %v157 = vsel %vm154, %v111, 0.0
    %v158 = vsel %vm154, %v113, 0.0
    %v159 = vsel %vm154, %v115, 0.0
    %v160 = vsel %vm154, %v117, 0.0
    %v161 = vsel %vm154, %v119, 0.0
    %v162 = vsel %vm154, %v121, 0.0
    %v163 = vsel %vm154, %v123, 0.0
    %v164 = vsel %vm154, %v125, 0.0
    %v165 = vsel %vm154, %v127, 0.0
    %v166 = vsel %vm154, %v129, 0.0
    %v167 = vsel %vm154, %v131, 0.0
    %v168 = vsel %vm154, %v133, 0.0
    %v169 = vsel %vm154, %v135, 0.0
    %v170 = vsel %vm154, %v137, 0.0
    %vm171 = vcmask 130048
    %172 = vst.msk [vmem:[#allocation5] sm:$0xff] %vm171, %v155
    %173 = vst.msk [vmem:[#allocation5 + $0x8] sm:$0xff] %vm171, %v156
    %174 = vst.msk [vmem:[#allocation5 + $0x10] sm:$0xff] %vm171, %v157
    %175 = vst.msk [vmem:[#allocation5 + $0x18] sm:$0xff] %vm171, %v158
    %176 = vst.msk [vmem:[#allocation5 + $0x20] sm:$0xff] %vm171, %v159
    %177 = vst.msk [vmem:[#allocation5 + $0x28] sm:$0xff] %vm171, %v160
    %178 = vst.msk [vmem:[#allocation5 + $0x30] sm:$0xff] %vm171, %v161
    %179 = vst.msk [vmem:[#allocation5 + $0x38] sm:$0xff] %vm171, %v162
    %180 = vst.msk [vmem:[#allocation5 + $0x40] sm:$0xff] %vm171, %v163
    %181 = vst.msk [vmem:[#allocation5 + $0x48] sm:$0xff] %vm171, %v164
    %182 = vst.msk [vmem:[#allocation5 + $0x50] sm:$0xff] %vm171, %v165
    %183 = vst.msk [vmem:[#allocation5 + $0x58] sm:$0xff] %vm171, %v166
    %184 = vst.msk [vmem:[#allocation5 + $0x60] sm:$0xff] %vm171, %v167
    %185 = vst.msk [vmem:[#allocation5 + $0x68] sm:$0xff] %vm171, %v168
    %186 = vst.msk [vmem:[#allocation5 + $0x70] sm:$0xff] %vm171, %v169
    %187 = vst.msk [vmem:[#allocation5 + $0x78] sm:$0xff] %vm171, %v170
    // Predicated region
    $region10: #{tpu_custom_call.1} parent=1 // pred_check
      _
    $region11: #{tpu_custom_call.1} parent=1 // pred_check_branch
      %189 = sbr.rel (0) target = $region13
    $region12: #{tpu_custom_call.1} parent=1 // pred_region
      %191 = vsyncadd [#allocation4], 0
      %s192 = sshll.u32 [#allocation5], 4
      %s193 = int_to_ptr.vmem [resolvable:$true] %s192
      %s194 = sshll.u32 %s1, 4
      %s195 = int_to_ptr.hbm [resolvable:$true] %s194
      %200 = dma.vmem_to_hbm [thread:$0]  %s193, 2048, %s195, [#allocation4], 128, 128, 8
    $region13: #{tpu_custom_call.1} parent=1 // pred_fallthru
      _
    // Predicated region
    $region14: #{tpu_custom_call.1} parent=1 // pred_check
      _
    $region15: #{tpu_custom_call.1} parent=1 // pred_check_branch
      %202 = sbr.rel (0) target = $region17
    $region16: #{tpu_custom_call.1} parent=1 // pred_region
      %204 = dma.done [#allocation4], 2048
    $region17: #{tpu_custom_call.1} parent=1 // pred_fallthru
      _
    %205 = vsyncpa [#allocation3], 1
    %206 = vsyncpa [#allocation4], 1

</llo_original>
